<compile_context>
chip_gen: v5e
topology: v5e:2x2
jax: 0.10.0
libtpu: 0.0.40
codegen_flags: <defaults>
</compile_context>

<pallas_src>
import jax
import jax.numpy as jnp
from jax.experimental import pallas as pl
from jax.experimental.pallas import tpu as pltpu

# TODO(synk): ConvBlock never passes `bit` (default None -> `None - 1` crashes the
# PyTorch init); we pick bit=4 to exercise the quantized (bit != 32) path.
BIT = 4
ACT_LEVELS = float(2 ** BIT - 1)          # 15 : act_quantization(b=bit), level=0 -> no clamp
W_LEVELS = float(2 ** (BIT - 1) - 1)      # 7  : weight_quantization(b=bit-1), level=0 -> no clamp
INV_Q = 1.0 / (ACT_LEVELS * W_LEVELS)     # folded into the BN scale/shift on the host
BN_EPS = 1e-5
LANE = 128
SUBLANE_BF16 = 16


def _round_up(x, m):
    return (x + m - 1) // m * m


# ---------------- pass 1: conv (one small-contraction MXU matmul per tile) + BN partials
def _conv_stats_kernel(x_ref, w_ref, y_ref, sum_ref, sumsq_ref):
    # x_ref: (1, KCp, bl)  bf16 integer-valued quantized activations (round(x*15))
    # w_ref: (Cp, KCp)     bf16 integer-valued quantized weights     (round(w*7))
    # Unscaled accumulate: true conv * (15*7); the constant is folded on the host.
    acc = jnp.dot(w_ref[...], x_ref[0], preferred_element_type=jnp.float32)   # (Cp, bl) f32
    y_ref[0] = acc.astype(y_ref.dtype)                                        # bf16 intermediate
    # Per-block partial BN statistics; channels stay on the sublane axis -> no relayout.
    # Padded lanes/taps are all-zero inputs, so they contribute exactly 0.
    sum_ref[0, 0] = jnp.sum(acc, axis=1, keepdims=True)                       # (Cp, 1)
    sumsq_ref[0, 0] = jnp.sum(acc * acc, axis=1, keepdims=True)               # (Cp, 1)


def quantize_weight_host(w, bit=BIT):
    # Mirrors the one-time weight pre-quantization in Conv1dSamePadding.__init__
    # (level=0 -> no clamp): sign(w) * round(|w|*7)/7.
    levels = float(2 ** (bit - 1) - 1)
    return jnp.sign(w) * (jnp.round(jnp.abs(w) * levels) / levels)


def conv_block_forward(x, weight, gamma, beta, *, stride=1, dilation=1, block_l=1024):
    """x: (N, C_in, L), weight: (C_out, C_in, K) pre-quantized -> (N, C_out, L_out)."""
    n, c_in, l_in = x.shape
    c_out, _, k = weight.shape

    # "same" padding exactly as conv1d_same_padding (odd pad -> extra pad on the right).
    padding = (l_in - 1) * stride - l_in + dilation * (k - 1) + 1
    pad_left = padding // 2
    pad_right = padding // 2 + (1 if padding % 2 != 0 else 0)

    # Activation quantization on the host (level=0 -> no clamp): integer-valued
    # round(x*15); exact in bf16 for |x*15| < 256, i.e. any sane activation.
    xq = jnp.round(x.astype(jnp.float32) * ACT_LEVELS)
    xq = jnp.pad(xq, ((0, 0), (0, 0), (pad_left, pad_right)))
    l_pad = l_in + pad_left + pad_right
    l_out = (l_pad - dilation * (k - 1) - 1) // stride + 1

    # Host-side unfold, lane-major positions: (N, K*C_in, L_out) bf16 integers.
    taps = [xq[:, :, t * dilation: t * dilation + stride * l_out: stride] for t in range(k)]
    xt = jnp.stack(taps, axis=1).reshape(n, k * c_in, l_out).astype(jnp.bfloat16)

    kc = k * c_in
    kc_pad = _round_up(kc, SUBLANE_BF16)              # contraction padded to bf16 sublanes only
    c_pad = _round_up(c_out, SUBLANE_BF16)            # output channels padded to bf16 sublanes only
    block_l = max(LANE, min(_round_up(block_l, LANE), _round_up(l_out, LANE)))
    l_out_pad = _round_up(l_out, block_l)
    n_lblk = l_out_pad // block_l

    xt = jnp.pad(xt, ((0, 0), (0, kc_pad - kc), (0, l_out_pad - l_out)))

    # Integer-valued quantized weights: init-time quantized weights are multiples
    # of 1/7, so round(w*7) recovers exact small integers (bf16-exact); the
    # module's in-forward re-quantization is idempotent.
    w2d = jnp.transpose(weight, (0, 2, 1)).reshape(c_out, kc)                 # (C_out, K*C_in)
    wi = jnp.round(w2d.astype(jnp.float32) * W_LEVELS).astype(jnp.bfloat16)
    wi = jnp.pad(wi, ((0, c_pad - c_out), (0, kc_pad - kc)))

    grid = (n, n_lblk)
    y, s, sq = pl.pallas_call(
        _conv_stats_kernel,
        grid=grid,
        out_shape=(
            jax.ShapeDtypeStruct((n, c_pad, l_out_pad), jnp.bfloat16),        # conv intermediate
            jax.ShapeDtypeStruct((n, n_lblk, c_pad, 1), jnp.float32),         # per-block sum
            jax.ShapeDtypeStruct((n, n_lblk, c_pad, 1), jnp.float32),         # per-block sum-sq
        ),
        in_specs=[
            pl.BlockSpec((1, kc_pad, block_l), lambda i, j: (i, 0, j)),
            pl.BlockSpec((c_pad, kc_pad), lambda i, j: (0, 0)),               # weight panel resident
        ],
        out_specs=(
            pl.BlockSpec((1, c_pad, block_l), lambda i, j: (i, 0, j)),
            pl.BlockSpec((1, 1, c_pad, 1), lambda i, j: (i, j, 0, 0)),
            pl.BlockSpec((1, 1, c_pad, 1), lambda i, j: (i, j, 0, 0)),
        ),
        compiler_params=pltpu.CompilerParams(
            dimension_semantics=("parallel", "parallel"),
            vmem_limit_bytes=32 * 1024 * 1024,   # explicit; fits v7x's scoped budget with headroom
        ),
    )(xt, wi)

    # ---- tiny cross-block reduction + fold BN (training-mode biased batch stats)
    # into per-channel scale/shift; the 1/(15*7) conv rescale is absorbed here.
    m_true = float(n * l_out)
    sum_c = jnp.sum(s, axis=(0, 1))[:c_out, 0]
    sumsq_c = jnp.sum(sq, axis=(0, 1))[:c_out, 0]
    mean = sum_c * (INV_Q / m_true)
    ex2 = sumsq_c * (INV_Q * INV_Q / m_true)
    var = jnp.maximum(ex2 - mean * mean, 0.0)                                 # clamp cancellation
    scale = gamma.astype(jnp.float32) * jax.lax.rsqrt(var + BN_EPS)
    shift = beta.astype(jnp.float32) - mean * scale

    # ---- pass 2: BN + ReLU + unpad in plain jnp (XLA fuses slice+affine+relu;
    # no padded slab round-trip, output is already NCL — no transpose).
    y_real = y[:, :c_out, :l_out].astype(jnp.float32)
    out = jnp.maximum(y_real * (scale * INV_Q)[None, :, None] + shift[None, :, None], 0.0)
    return out


# ---------------- pure-JAX reference of the module's forward (for a sanity check)
def _reference_forward(x, weight, gamma, beta, *, stride=1, dilation=1):
    l_in = x.shape[2]
    k = weight.shape[2]
    padding = (l_in - 1) * stride - l_in + dilation * (k - 1) + 1
    pad_left = padding // 2
    pad_right = padding // 2 + (1 if padding % 2 != 0 else 0)
    xq = jnp.round(x * ACT_LEVELS) / ACT_LEVELS                 # act quant (level=0)
    y = jax.lax.conv_general_dilated(
        xq, weight, window_strides=(stride,), padding=[(pad_left, pad_right)],
        rhs_dilation=(dilation,), dimension_numbers=("NCH", "OIH", "NCH"))
    mean = jnp.mean(y, axis=(0, 2), keepdims=True)
    var = jnp.var(y, axis=(0, 2), keepdims=True)                # biased, training-mode BN
    yn = (y - mean) * jax.lax.rsqrt(var + BN_EPS)
    return jnp.maximum(yn * gamma[None, :, None] + beta[None, :, None], 0.0)


if __name__ == "__main__":
    key = jax.random.PRNGKey(0)
    kx, kw = jax.random.split(key)

    N, C_IN, C_OUT, L, K, STRIDE = 2, 4, 8, 16, 3, 1
    x = jax.random.normal(kx, (N, C_IN, L), dtype=jnp.float32)

    # Conv1dSamePadding.__init__: weight = randn(...), pre-quantized once (bit != 32).
    w0 = jax.random.normal(kw, (C_OUT, C_IN, K), dtype=jnp.float32)
    weight = quantize_weight_host(w0, BIT)

    # BatchNorm1d init: gamma=1, beta=0; conv bias=False (default).
    gamma = jnp.ones((C_OUT,), jnp.float32)
    beta = jnp.zeros((C_OUT,), jnp.float32)

    out = conv_block_forward(x, weight, gamma, beta, stride=STRIDE)
    out = jax.block_until_ready(out)
    assert out.shape == (N, C_OUT, L)
    assert bool(jnp.all(jnp.isfinite(out)))

    ref = _reference_forward(x, weight, gamma, beta, stride=STRIDE)
    assert bool(jnp.allclose(out, ref, rtol=5e-2, atol=5e-2)), float(jnp.max(jnp.abs(out - ref)))
    print("KERNEL_OK")
</pallas_src>

<mosaic_0001>
module attributes {stable_mosaic.version = 11 : i64} {
  func.func @_conv_stats_kernel(%arg0: i32, %arg1: i32, %arg2: memref<1x16x128xbf16, #tpu.memory_space<vmem>>, %arg3: memref<16x16xbf16, #tpu.memory_space<vmem>>, %arg4: memref<1x16x128xbf16, #tpu.memory_space<vmem>>, %arg5: memref<1x1x16x1xf32, #tpu.memory_space<vmem>>, %arg6: memref<1x1x16x1xf32, #tpu.memory_space<vmem>>) attributes {dimension_semantics = [#tpu.dimension_semantics<parallel>, #tpu.dimension_semantics<parallel>], iteration_bounds = array<i64: 2, 1>, scalar_prefetch = 0 : i64, scratch_operands = 0 : i64, tpu.core_type = #tpu.core_type<tc>, window_params = [{transform_indices = @transform_0, window_bounds = array<i64: 1, 16, 128>}, {pipeline_mode = #tpu.pipeline_mode<synchronous>, transform_indices = @transform_1, window_bounds = array<i64: 16, 16>}, {transform_indices = @transform_2, window_bounds = array<i64: 1, 16, 128>}, {transform_indices = @transform_3, window_bounds = array<i64: 1, 1, 16, 1>}, {transform_indices = @transform_4, window_bounds = array<i64: 1, 1, 16, 1>}]} {
    %c0 = arith.constant 0 : index
    %c0_0 = arith.constant 0 : index
    %0 = vector.load %arg3[%c0, %c0_0] : memref<16x16xbf16, #tpu.memory_space<vmem>>, vector<16x16xbf16>
    %c0_1 = arith.constant 0 : index
    %c0_2 = arith.constant 0 : index
    %c0_3 = arith.constant 0 : index
    %1 = vector.load %arg2[%c0_1, %c0_2, %c0_3] : memref<1x16x128xbf16, #tpu.memory_space<vmem>>, vector<1x16x128xbf16>
    %2 = vector.shape_cast %1 : vector<1x16x128xbf16> to vector<16x128xbf16>
    %cst = arith.constant dense<0.000000e+00> : vector<16x128xf32>
    %3 = tpu.matmul %0, %2, %cst {dimension_numbers = #tpu.dot_dimension_numbers<[1], [0], [0], [1], [0, 0, 1, 1], [], []>} : vector<16x16xbf16>, vector<16x128xbf16>, vector<16x128xf32> -> vector<16x128xf32>
    %4 = arith.truncf %3 : vector<16x128xf32> to vector<16x128xbf16>
    %c0_4 = arith.constant 0 : index
    %c0_5 = arith.constant 0 : index
    %c0_6 = arith.constant 0 : index
    %5 = vector.load %arg4[%c0_4, %c0_5, %c0_6] : memref<1x16x128xbf16, #tpu.memory_space<vmem>>, vector<1x16x128xbf16>
    %6 = vector.shape_cast %5 : vector<1x16x128xbf16> to vector<16x128xbf16>
    %7 = vector.shape_cast %4 : vector<16x128xbf16> to vector<1x16x128xbf16>
    tpu.vector_store %arg4[%c0_4, %c0_5, %c0_6], %7 {strides = array<i32>} : memref<1x16x128xbf16, #tpu.memory_space<vmem>>, vector<1x16x128xbf16>,
    %cst_7 = arith.constant dense<0.000000e+00> : vector<16xf32>
    %8 = vector.multi_reduction <add>, %3, %cst_7 [1] : vector<16x128xf32> to vector<16xf32>
    %9 = vector.shape_cast %8 : vector<16xf32> to vector<16x1xf32>
    %c0_8 = arith.constant 0 : index
    %c0_9 = arith.constant 0 : index
    %c0_10 = arith.constant 0 : index
    %c0_11 = arith.constant 0 : index
    %10 = vector.load %arg5[%c0_8, %c0_9, %c0_10, %c0_11] : memref<1x1x16x1xf32, #tpu.memory_space<vmem>>, vector<1x1x16x1xf32>
    %11 = vector.shape_cast %10 : vector<1x1x16x1xf32> to vector<16x1xf32>
    %12 = vector.shape_cast %9 : vector<16x1xf32> to vector<1x1x16x1xf32>
    tpu.vector_store %arg5[%c0_8, %c0_9, %c0_10, %c0_11], %12 {strides = array<i32>} : memref<1x1x16x1xf32, #tpu.memory_space<vmem>>, vector<1x1x16x1xf32>,
    %13 = arith.mulf %3, %3 : vector<16x128xf32>
    %cst_12 = arith.constant dense<0.000000e+00> : vector<16xf32>
    %14 = vector.multi_reduction <add>, %13, %cst_12 [1] : vector<16x128xf32> to vector<16xf32>
    %15 = vector.shape_cast %14 : vector<16xf32> to vector<16x1xf32>
    %c0_13 = arith.constant 0 : index
    %c0_14 = arith.constant 0 : index
    %c0_15 = arith.constant 0 : index
    %c0_16 = arith.constant 0 : index
    %16 = vector.load %arg6[%c0_13, %c0_14, %c0_15, %c0_16] : memref<1x1x16x1xf32, #tpu.memory_space<vmem>>, vector<1x1x16x1xf32>
    %17 = vector.shape_cast %16 : vector<1x1x16x1xf32> to vector<16x1xf32>
    %18 = vector.shape_cast %15 : vector<16x1xf32> to vector<1x1x16x1xf32>
    tpu.vector_store %arg6[%c0_13, %c0_14, %c0_15, %c0_16], %18 {strides = array<i32>} : memref<1x1x16x1xf32, #tpu.memory_space<vmem>>, vector<1x1x16x1xf32>,
    return
  }
  func.func @transform_0(%arg0: i32, %arg1: i32) -> (i32, i32, i32) {
    %c0_i32 = arith.constant 0 : i32
    %c0_i32_0 = arith.constant 0 : i32
    return %arg0, %c0_i32, %arg1 : i32, i32, i32
  }
  func.func @transform_1(%arg0: i32, %arg1: i32) -> (i32, i32) {
    %c0_i32 = arith.constant 0 : i32
    %c0_i32_0 = arith.constant 0 : i32
    %c0_i32_1 = arith.constant 0 : i32
    return %c0_i32, %c0_i32_0 : i32, i32
  }
  func.func @transform_2(%arg0: i32, %arg1: i32) -> (i32, i32, i32) {
    %c0_i32 = arith.constant 0 : i32
    %c0_i32_0 = arith.constant 0 : i32
    return %arg0, %c0_i32, %arg1 : i32, i32, i32
  }
  func.func @transform_3(%arg0: i32, %arg1: i32) -> (i32, i32, i32, i32) {
    %c0_i32 = arith.constant 0 : i32
    %c0_i32_0 = arith.constant 0 : i32
    %c0_i32_1 = arith.constant 0 : i32
    return %arg0, %arg1, %c0_i32, %c0_i32_0 : i32, i32, i32, i32
  }
  func.func @transform_4(%arg0: i32, %arg1: i32) -> (i32, i32, i32, i32) {
    %c0_i32 = arith.constant 0 : i32
    %c0_i32_0 = arith.constant 0 : i32
    %c0_i32_1 = arith.constant 0 : i32
    return %arg0, %arg1, %c0_i32, %c0_i32_0 : i32, i32, i32, i32
  }
}

</mosaic_0001>

<llo_original>
// kernel: tpu_custom_call.1
$region0: #{tpu_custom_call.1}
  #allocation0 [shape = 'u32[]', space=smem, size = 0x4, offset = 0x4, fixed_abs, tag = 'smem constant byte address 0x4 - core index']
  #allocation1 [shape = 'u32[72,128]{1,0:T(1,128)}', space=vmem, size = 0x9000, scoped, tag = 'internal scratch']
  %s0 = inlined_call_operand.hbm [shape: bf16[2,16,128], index: 0, kind: input, shape index: {}]
  %s1 = inlined_call_operand.hbm [shape: bf16[16,16], index: 1, kind: input, shape index: {}]
  %s2 = inlined_call_operand.hbm [shape: bf16[2,16,128], index: 2, kind: output, shape index: {0}]
  %s3 = inlined_call_operand.vmem [shape: f32[2,1,16,1], index: 3, kind: output, shape index: {1}]
  %s4 = inlined_call_operand.vmem [shape: f32[2,1,16,1], index: 4, kind: output, shape index: {2}]
  %5 = xla_tuple %s2, %s3, %s4
  %s6 = sld [smem:[#allocation0]]
  $region65: #{tpu_custom_call.1} parent=0
    _
  %s8 = ssub.s32 1, %s6
  %s9 = scalar_select 0, %s8, %s6
  $region1: #{tpu_custom_call.1} parent=0
    #allocation2 [shape = 'u8[8192]{0}', space=vmem, size = 0x2000, scoped, tag = 'input window, operand 0']
    #allocation3 [shape = 's32[2]{0}', space=sflag, size = 0x8, scoped, tag = 'scoped memory for tpu_custom_call.1']
    #allocation4 [shape = 's32[2]{0}', space=sflag, size = 0x8, scoped, tag = 'scoped memory for tpu_custom_call.1']
    #allocation5 [shape = 'u8[4096]{0}', space=vmem, size = 0x1000, scoped, tag = 'input window, operand 1, single buffered']
    #allocation6 [shape = 's32[1]{0}', space=sflag, size = 0x4, scoped, tag = 'scoped memory for tpu_custom_call.1']
    #allocation7 [shape = 'u8[8192]{0}', space=vmem, size = 0x2000, scoped, tag = 'output window, operand 0']
    %10 = vsyncpa [#allocation3], 0
    %s11 = scalar_lea.sflag [#allocation3], 1
    %12 = vsyncpa %s11, 0
    %13 = vsyncpa [#allocation6], 0
    %14 = vsyncpa [#allocation4], 0
    %s15 = scalar_lea.sflag [#allocation4], 1
    %16 = vsyncpa %s15, 0
    loop: start=0, step=1, limit=4
    $region2: #{tpu_custom_call.1} parent=1 // loop_pre_header
      _
    $region3: #{tpu_custom_call.1} parent=1 // loop_header
      %s18 = sphi 0, %s22
      %p19 = scmp.ge.s32.totalorder %s18, 4
      %s25 = sphi 0, %s37
      %s26 = sphi 0, %s33
      %s27 = sphi 0, %s25
      %s28 = sphi 0, %s26
      %s29 = sphi 0, %s27
      %s30 = sphi 0, %s28
      %s42 = sphi 0, %s44
      %s45 = sphi 0, %s42
      %s46 = sphi 0, %s45
      %s62 = sphi 0, %s46
      %s66 = sphi 0, %s66
      %s68 = sphi 0, %s66
      %s69 = sphi 0, %s68
      %s83 = sphi 0, %s69
      %s91 = sphi 0, %s93
      %s94 = sphi 0, %s91
      %s95 = sphi 0, %s94
      %s111 = sphi 0, %s95
      %s119 = sphi 0, %s121
      %s122 = sphi 0, %s119
      %s123 = sphi 0, %s122
      %s139 = sphi 0, %s123
      %s147 = sphi 0, %s149
      %s150 = sphi 0, %s147
      %s151 = sphi 0, %s150
      %s167 = sphi 0, %s151
    $region4: #{tpu_custom_call.1} parent=1 // loop_header_branch
      %21 = sbr.rel (%p19) target = $region8
    $region5: #{tpu_custom_call.1} parent=1 // loop_body
      %s23 = ssub.s32 %s18, 1
      %s24 = ssub.s32 %s18, 2
      %s31 = sadd.s32 1, %s26
      %p32 = scmp.ge.s32.totalorder %s31, 1
      %s33 = scalar_select %p32, 0, %s31
      %s34 = sadd.s32 1, %s25
      %s35 = scalar_select %p32, %s34, %s25
      %p36 = scmp.ge.s32.totalorder %s35, 2
      %s37 = scalar_select %p36, 0, %s35
      %s38 = ssub.s32 %s25, %s37
      %s39 = ssub.s32 %s26, %s33
      %s40 = sor.u32 %s38, %s39
      %p41 = scmp.eq.s32.totalorder %s40, 0
      %s43 = sadd.s32 %s42, 1
      %s44 = scalar_select %p41, %s42, %s43
      %p47 = pneg %p41
      %p48 = scmp.eq.s32.totalorder %s18, 1
      %p49 = por %p47, %p48
      %p50 = scmp.ne.s32.totalorder %s42, %s45
      %p51 = scmp.eq.s32.totalorder %s18, 0
      %p52 = por %p50, %p51
      %p53 = scmp.ne.s32.totalorder %s42, %s45
      %p54 = scmp.eq.s32.totalorder %s23, 1
      %p55 = por %p53, %p54
      %p56 = scmp.ne.s32.totalorder %s45, %s46
      %p57 = scmp.eq.s32.totalorder %s23, 0
      %p58 = por %p56, %p57
      %p59 = scmp.ne.s32.totalorder %s45, %s46
      %p60 = scmp.eq.s32.totalorder %s24, 1
      %p61 = por %p59, %p60
      %p63 = scmp.ne.s32.totalorder %s46, %s62
      %p64 = scmp.eq.s32.totalorder %s24, 0
      %p65 = por %p63, %p64
      %s67 = sadd.s32 %s66, 1
      %p70 = scmp.eq.s32.totalorder %s18, 1
      %p71 = scmp.ne.s32.totalorder %s66, %s68
      %p72 = scmp.eq.s32.totalorder %s18, 0
      %p73 = por %p71, %p72
      %p74 = scmp.ne.s32.totalorder %s66, %s68
      %p75 = scmp.eq.s32.totalorder %s23, 1
      %p76 = por %p74, %p75
      %p77 = scmp.ne.s32.totalorder %s68, %s69
      %p78 = scmp.eq.s32.totalorder %s23, 0
      %p79 = por %p77, %p78
      %p80 = scmp.ne.s32.totalorder %s68, %s69
      %p81 = scmp.eq.s32.totalorder %s24, 1
      %p82 = por %p80, %p81
      %p84 = scmp.ne.s32.totalorder %s69, %s83
      %p85 = scmp.eq.s32.totalorder %s24, 0
      %p86 = por %p84, %p85
      %s87 = ssub.s32 %s25, %s37
      %s88 = ssub.s32 %s26, %s33
      %s89 = sor.u32 %s87, %s88
      %p90 = scmp.eq.s32.totalorder %s89, 0
      %s92 = sadd.s32 %s91, 1
      %s93 = scalar_select %p90, %s91, %s92
      %p96 = pneg %p90
      %p97 = scmp.eq.s32.totalorder %s18, 1
      %p98 = por %p96, %p97
      %p99 = scmp.ne.s32.totalorder %s91, %s94
      %p100 = scmp.eq.s32.totalorder %s18, 0
      %p101 = por %p99, %p100
      %p102 = scmp.ne.s32.totalorder %s91, %s94
      %p103 = scmp.eq.s32.totalorder %s23, 1
      %p104 = por %p102, %p103
      %p105 = scmp.ne.s32.totalorder %s94, %s95
      %p106 = scmp.eq.s32.totalorder %s23, 0
      %p107 = por %p105, %p106
      %p108 = scmp.ne.s32.totalorder %s94, %s95
      %p109 = scmp.eq.s32.totalorder %s24, 1
      %p110 = por %p108, %p109
      %p112 = scmp.ne.s32.totalorder %s95, %s111
      %p113 = scmp.eq.s32.totalorder %s24, 0
      %p114 = por %p112, %p113
      %s115 = ssub.s32 %s25, %s37
      %s116 = ssub.s32 %s26, %s33
      %s117 = sor.u32 %s115, %s116
      %p118 = scmp.eq.s32.totalorder %s117, 0
      %s120 = sadd.s32 %s119, 1
      %s121 = scalar_select %p118, %s119, %s120
      %p124 = pneg %p118
      %p125 = scmp.eq.s32.totalorder %s18, 1
      %p126 = por %p124, %p125
      %p127 = scmp.ne.s32.totalorder %s119, %s122
      %p128 = scmp.eq.s32.totalorder %s18, 0
      %p129 = por %p127, %p128
      %p130 = scmp.ne.s32.totalorder %s119, %s122
      %p131 = scmp.eq.s32.totalorder %s23, 1
      %p132 = por %p130, %p131
      %p133 = scmp.ne.s32.totalorder %s122, %s123
      %p134 = scmp.eq.s32.totalorder %s23, 0
      %p135 = por %p133, %p134
      %p136 = scmp.ne.s32.totalorder %s122, %s123
      %p137 = scmp.eq.s32.totalorder %s24, 1
      %p138 = por %p136, %p137
      %p140 = scmp.ne.s32.totalorder %s123, %s139
      %p141 = scmp.eq.s32.totalorder %s24, 0
      %p142 = por %p140, %p141
      %s143 = ssub.s32 %s25, %s37
      %s144 = ssub.s32 %s26, %s33
      %s145 = sor.u32 %s143, %s144
      %p146 = scmp.eq.s32.totalorder %s145, 0
      %s148 = sadd.s32 %s147, 1
      %s149 = scalar_select %p146, %s147, %s148
      %p152 = pneg %p146
      %p153 = scmp.eq.s32.totalorder %s18, 1
      %p154 = por %p152, %p153
      %p155 = scmp.ne.s32.totalorder %s147, %s150
      %p156 = scmp.eq.s32.totalorder %s18, 0
      %p157 = por %p155, %p156
      %p158 = scmp.ne.s32.totalorder %s147, %s150
      %p159 = scmp.eq.s32.totalorder %s23, 1
      %p160 = por %p158, %p159
      %p161 = scmp.ne.s32.totalorder %s150, %s151
      %p162 = scmp.eq.s32.totalorder %s23, 0
      %p163 = por %p161, %p162
      %p164 = scmp.ne.s32.totalorder %s150, %s151
      %p165 = scmp.eq.s32.totalorder %s24, 1
      %p166 = por %p164, %p165
      %p168 = scmp.ne.s32.totalorder %s151, %s167
      %p169 = scmp.eq.s32.totalorder %s24, 0
      %p170 = por %p168, %p169
      %p171 = scmp.le.s32.totalorder 1, %s18
      %p172 = scmp.lt.s32.totalorder %s18, 3
      %p173 = pnand %p171, %p172
      %p174 = pneg %p173
      // Predicated region
      $region9: #{tpu_custom_call.1} parent=5 // pred_check
        _
      $region10: #{tpu_custom_call.1} parent=5 // pred_check_branch
        %176 = sbr.rel (%p173) target = $region12
      $region11: #{tpu_custom_call.1} parent=5 // pred_region
        %s177 = ssub.s32 %s18, 1
        // Predicated region
        $region13: #{tpu_custom_call.1} parent=11 // pred_check
          %p178 = pneg %p79
        $region14: #{tpu_custom_call.1} parent=11 // pred_check_branch
          %180 = sbr.rel (%p178) target = $region16
        $region15: #{tpu_custom_call.1} parent=11 // pred_region
          %182 = vsyncadd [#allocation6], 0
          %s183 = sshll.u32 %s1, 4
          %s184 = int_to_ptr.hbm [resolvable:$true] %s183
          %s185 = sshll.u32 [#allocation5], 4
          %s186 = int_to_ptr.vmem [resolvable:$true] %s185
          %191 = dma.hbm_to_vmem [thread:$0]  %s184, 128, %s186, [#allocation6], 64, 64, 4
        $region16: #{tpu_custom_call.1} parent=11 // pred_fallthru
          _
      $region12: #{tpu_custom_call.1} parent=5 // pred_fallthru
        _
      %p192 = scmp.lt.s32.totalorder %s18, 2
      // Predicated region
      $region17: #{tpu_custom_call.1} parent=5 // pred_check
        %p193 = pneg %p192
      $region18: #{tpu_custom_call.1} parent=5 // pred_check_branch
        %195 = sbr.rel (%p193) target = $region20
      $region19: #{tpu_custom_call.1} parent=5 // pred_region
        // Predicated region
        $region21: #{tpu_custom_call.1} parent=19 // pred_check
          %p196 = pneg %p52
        $region22: #{tpu_custom_call.1} parent=19 // pred_check_branch
          %198 = sbr.rel (%p196) target = $region24
        $region23: #{tpu_custom_call.1} parent=19 // pred_region
          %s199 = sand.u32 %s42, 1
          %s200 = scalar_lea.sflag [#allocation3], %s199
          %s201 = sand.u32 %s42, 1
          %s202 = smul.addr %s201, 8
          %s203 = scalar_lea.vmem [#allocation2], %s202
          %205 = vsyncadd %s200, 0
          %s206 = smul.addr %s25, 2
          %s207 = sadd.s32 %s26, %s206
          %s208 = smul.addr %s207, 4
          %s209 = scalar_lea.hbm %s0, %s208
          %s210 = sshll.u32 %s209, 4
          %s211 = int_to_ptr.hbm [resolvable:$true] %s210
          %s212 = sshll.u32 %s203, 4
          %s213 = int_to_ptr.vmem [resolvable:$true] %s212
          %218 = dma.hbm_to_vmem [thread:$0]  %s211, 128, %s213, %s200, 64, 64, 4
        $region24: #{tpu_custom_call.1} parent=19 // pred_fallthru
          _
      $region20: #{tpu_custom_call.1} parent=5 // pred_fallthru
        _
      %p219 = scmp.le.s32.totalorder 1, %s18
      %p220 = scmp.lt.s32.totalorder %s18, 3
      %p221 = pnand %p219, %p220
      %p222 = pneg %p221
      // Predicated region
      $region25: #{tpu_custom_call.1} parent=5 // pred_check
        _
      $region26: #{tpu_custom_call.1} parent=5 // pred_check_branch
        %224 = sbr.rel (%p221) target = $region28
      $region27: #{tpu_custom_call.1} parent=5 // pred_region
        %s225 = ssub.s32 %s18, 1
        %s226 = sand.u32 %s45, 1
        %s227 = scalar_lea.sflag [#allocation3], %s226
        %s228 = sand.u32 %s45, 1
        %s229 = smul.addr %s228, 8
        %s230 = scalar_lea.vmem [#allocation2], %s229
        // Predicated region
        $region29: #{tpu_custom_call.1} parent=27 // pred_check
          %p231 = pneg %p58
        $region30: #{tpu_custom_call.1} parent=27 // pred_check_branch
          %233 = sbr.rel (%p231) target = $region32
        $region31: #{tpu_custom_call.1} parent=27 // pred_region
          %235 = dma.done %s227, 128
        $region32: #{tpu_custom_call.1} parent=27 // pred_fallthru
          _
        // Predicated region
        $region33: #{tpu_custom_call.1} parent=27 // pred_check
          %p236 = pneg %p79
        $region34: #{tpu_custom_call.1} parent=27 // pred_check_branch
          %238 = sbr.rel (%p236) target = $region36
        $region35: #{tpu_custom_call.1} parent=27 // pred_region
          %240 = dma.done [#allocation6], 128
        $region36: #{tpu_custom_call.1} parent=27 // pred_fallthru
          _
        %s241 = sand.u32 %s45, 1
        %s242 = scalar_lea.sflag [#allocation3], %s241
        %s243 = sand.u32 %s45, 1
        %s244 = smul.addr %s243, 8
        %s245 = scalar_lea.vmem [#allocation2], %s244
        %p246 = pneg %p58
        %p247 = pneg %p55
        %p248 = pneg %p79
        %p249 = pneg %p76
        %p250 = pneg %p107
        %p251 = pneg %p104
        %s252 = sand.u32 %s94, 1
        %s253 = scalar_lea.sflag [#allocation4], %s252
        %s254 = sand.u32 %s94, 1
        %s255 = smul.addr %s254, 8
        %s256 = scalar_lea.vmem [#allocation7], %s255
        %p257 = pneg %p135
        %p258 = pneg %p132
        %p259 = scmp.lt.s32.totalorder %s27, 1
        %s260 = scalar_select %p259, %s27, 1
        %p261 = scmp.lt.s32.totalorder %s28, 0
        %s262 = scalar_select %p261, %s28, 0
        %s263 = smul.addr %s262, 2
        %s264 = smul.addr %s260, 2
        %s265 = sadd.s32 %s263, %s264
        %s266 = smul.addr %s265, 8
        %s267 = scalar_lea.vmem %s3, %s266
        %p268 = pneg %p163
        %p269 = pneg %p160
        %p270 = scmp.lt.s32.totalorder %s27, 1
        %s271 = scalar_select %p270, %s27, 1
        %p272 = scmp.lt.s32.totalorder %s28, 0
        %s273 = scalar_select %p272, %s28, 0
        %s274 = smul.addr %s273, 2
        %s275 = smul.addr %s271, 2
        %s276 = sadd.s32 %s274, %s275
        %s277 = smul.addr %s276, 8
        %s278 = scalar_lea.vmem %s4, %s277
        %p279 = scmp.lt.s32.totalorder %s27, 1
        %s280 = scalar_select %p279, %s27, 1
        %p281 = scmp.lt.s32.totalorder %s28, 0
        %s282 = scalar_select %p281, %s28, 0
        %s283 = smul.addr %s282, 2
        %s284 = smul.addr %s280, 2
        %s285 = sadd.s32 %s283, %s284
        %s286 = smul.addr %s285, 8
        %s287 = scalar_lea.vmem %s3, %s286
        %p288 = scmp.lt.s32.totalorder %s27, 1
        %s289 = scalar_select %p288, %s27, 1
        %p290 = scmp.lt.s32.totalorder %s28, 0
        %s291 = scalar_select %p290, %s28, 0
        %s292 = smul.addr %s291, 2
        %s293 = smul.addr %s289, 2
        %s294 = sadd.s32 %s292, %s293
        %s295 = smul.addr %s294, 8
        %s296 = scalar_lea.vmem %s4, %s295
        %v298 = vld [vmem:[#allocation5] sm:$0xf]
        %v299 = vld [vmem:[#allocation5 + $0x4] sm:$0xf]
        %v300 = vld [vmem:[%s230] sm:$0xf]
        %v301 = vld [vmem:[%s230 + $0x4] sm:$0xf]
        %v304 = vunpack.c.l.b16 %v298
        %v305 = vunpack.c.l.b16 %v299
        %v306 = vpack.c.b16 %v305, %v304
        %v309 = vunpack.c.l.b16 %v300
        %v310 = vunpack.c.l.b16 %v301
        %v311 = vpack.c.b16 %v310, %v309
        %vm313 = vcmask 130048
        %v315 = vsel %vm313, %v306, 0
        %317 = vmatpush.bf16.msra.mxu0 0
        %318 = vmatpush.bf16.msra.mxu0 0
        %319 = vmatpush.bf16.msra.mxu0 0
        %320 = vmatpush.bf16.msra.mxu0 0
        %321 = vmatpush.bf16.msra.mxu0 0
        %322 = vmatpush.bf16.msra.mxu0 0
        %323 = vmatpush.bf16.msra.mxu0 0
        %324 = vmatpush.bf16.msra.mxu0 %v311
        %325 = vmatmul.bf16.gmra.mxu0 %v315
        %v326 = vpop.f32.mrf.mxu0
        %v327 = vadd.f32 0.0, %v326
        %v328 = vpop.f32.mrf.mxu0
        %v329 = vadd.f32 0.0, %v328
        %330 = vdwg.mxu0
        %v331 = vpack.c.bf16 %v327, %v327
        %v332 = vpack.c.bf16 %v329, %v329
        %333 = vst [vmem:[%s256] sm:$0xf] %v331
        %334 = vst [vmem:[%s256 + $0x4] sm:$0xf] %v332
        %335 = vadd.xlane.f32.xlu0 %v327
        %v336 = vpop.xlane.xlu0 %335
        %337 = vadd.xlane.f32.xlu0 %v329
        %v338 = vpop.xlane.xlu0 %337
        %vm339 = vcmask 7168
        %340 = vst.msk [vmem:[%s287] sm:$0xff] %vm339, %v336
        %341 = vst.msk [vmem:[%s287 + $0x8] sm:$0xff] %vm339, %v338
        %v342 = vmul.f32 %v327, %v327
        %v343 = vmul.f32 %v329, %v329
        %344 = vadd.xlane.f32.xlu0 %v342
        %v345 = vpop.xlane.xlu0 %344
        %346 = vadd.xlane.f32.xlu0 %v343
        %v347 = vpop.xlane.xlu0 %346
        %348 = vst.msk [vmem:[%s296] sm:$0xff] %vm339, %v345
        %349 = vst.msk [vmem:[%s296 + $0x8] sm:$0xff] %vm339, %v347
        %s350 = sand.u32 %s94, 1
        %s351 = scalar_lea.sflag [#allocation4], %s350
        %s352 = sand.u32 %s94, 1
        %s353 = smul.addr %s352, 8
        %s354 = scalar_lea.vmem [#allocation7], %s353
        %p355 = scmp.lt.s32.totalorder %s27, 1
        %s356 = scalar_select %p355, %s27, 1
        %p357 = scmp.lt.s32.totalorder %s28, 0
        %s358 = scalar_select %p357, %s28, 0
        %s359 = smul.addr %s358, 2
        %s360 = smul.addr %s356, 2
        %s361 = sadd.s32 %s359, %s360
        %s362 = smul.addr %s361, 8
        %s363 = scalar_lea.vmem %s3, %s362
        %p364 = scmp.lt.s32.totalorder %s27, 1
        %s365 = scalar_select %p364, %s27, 1
        %p366 = scmp.lt.s32.totalorder %s28, 0
        %s367 = scalar_select %p366, %s28, 0
        %s368 = smul.addr %s367, 2
        %s369 = smul.addr %s365, 2
        %s370 = sadd.s32 %s368, %s369
        %s371 = smul.addr %s370, 8
        %s372 = scalar_lea.vmem %s4, %s371
        // Predicated region
        $region37: #{tpu_custom_call.1} parent=27 // pred_check
          %p373 = pneg %p104
        $region38: #{tpu_custom_call.1} parent=27 // pred_check_branch
          %375 = sbr.rel (%p373) target = $region40
        $region39: #{tpu_custom_call.1} parent=27 // pred_region
          %377 = vsyncadd %s351, 0
          %s378 = smul.addr %s27, 2
          %s379 = sadd.s32 %s28, %s378
          %s380 = smul.addr %s379, 4
          %s381 = scalar_lea.hbm %s2, %s380
          %s382 = sshll.u32 %s354, 4
          %s383 = int_to_ptr.vmem [resolvable:$true] %s382
          %s384 = sshll.u32 %s381, 4
          %s385 = int_to_ptr.hbm [resolvable:$true] %s384
          %390 = dma.vmem_to_hbm [thread:$0]  %s383, 128, %s385, %s351, 64, 64, 4
        $region40: #{tpu_custom_call.1} parent=27 // pred_fallthru
          _
        // Predicated region
        $region41: #{tpu_custom_call.1} parent=27 // pred_check
          %p391 = pneg %p132
        $region42: #{tpu_custom_call.1} parent=27 // pred_check_branch
          %393 = sbr.rel (%p391) target = $region44
        $region43: #{tpu_custom_call.1} parent=27 // pred_region
          _
        $region44: #{tpu_custom_call.1} parent=27 // pred_fallthru
          _
        // Predicated region
        $region45: #{tpu_custom_call.1} parent=27 // pred_check
          %p394 = pneg %p160
        $region46: #{tpu_custom_call.1} parent=27 // pred_check_branch
          %396 = sbr.rel (%p394) target = $region48
        $region47: #{tpu_custom_call.1} parent=27 // pred_region
          _
        $region48: #{tpu_custom_call.1} parent=27 // pred_fallthru
          _
      $region28: #{tpu_custom_call.1} parent=5 // pred_fallthru
        _
      %p397 = scmp.le.s32.totalorder 2, %s18
      // Predicated region
      $region49: #{tpu_custom_call.1} parent=5 // pred_check
        %p398 = pneg %p397
      $region50: #{tpu_custom_call.1} parent=5 // pred_check_branch
        %400 = sbr.rel (%p398) target = $region52
      $region51: #{tpu_custom_call.1} parent=5 // pred_region
        %s401 = ssub.s32 %s18, 2
        // Predicated region
        $region53: #{tpu_custom_call.1} parent=51 // pred_check
          %p402 = pneg %p110
        $region54: #{tpu_custom_call.1} parent=51 // pred_check_branch
          %404 = sbr.rel (%p402) target = $region56
        $region55: #{tpu_custom_call.1} parent=51 // pred_region
          %s405 = sand.u32 %s95, 1
          %s406 = scalar_lea.sflag [#allocation4], %s405
          %s407 = sand.u32 %s95, 1
          %s408 = smul.addr %s407, 8
          %s409 = scalar_lea.vmem [#allocation7], %s408
          %411 = dma.done %s406, 128
        $region56: #{tpu_custom_call.1} parent=51 // pred_fallthru
          _
        // Predicated region
        $region57: #{tpu_custom_call.1} parent=51 // pred_check
          %p412 = pneg %p138
        $region58: #{tpu_custom_call.1} parent=51 // pred_check_branch
          %414 = sbr.rel (%p412) target = $region60
        $region59: #{tpu_custom_call.1} parent=51 // pred_region
          %p415 = scmp.lt.s32.totalorder %s29, 1
          %s416 = scalar_select %p415, %s29, 1
          %p417 = scmp.lt.s32.totalorder %s30, 0
          %s418 = scalar_select %p417, %s30, 0
          %s419 = smul.addr %s418, 2
          %s420 = smul.addr %s416, 2
          %s421 = sadd.s32 %s419, %s420
          %s422 = smul.addr %s421, 8
          %s423 = scalar_lea.vmem %s3, %s422
        $region60: #{tpu_custom_call.1} parent=51 // pred_fallthru
          _
        // Predicated region
        $region61: #{tpu_custom_call.1} parent=51 // pred_check
          %p424 = pneg %p166
        $region62: #{tpu_custom_call.1} parent=51 // pred_check_branch
          %426 = sbr.rel (%p424) target = $region64
        $region63: #{tpu_custom_call.1} parent=51 // pred_region
          %p427 = scmp.lt.s32.totalorder %s29, 1
          %s428 = scalar_select %p427, %s29, 1
          %p429 = scmp.lt.s32.totalorder %s30, 0
          %s430 = scalar_select %p429, %s30, 0
          %s431 = smul.addr %s430, 2
          %s432 = smul.addr %s428, 2
          %s433 = sadd.s32 %s431, %s432
          %s434 = smul.addr %s433, 8
          %s435 = scalar_lea.vmem %s4, %s434
        $region64: #{tpu_custom_call.1} parent=51 // pred_fallthru
          _
      $region52: #{tpu_custom_call.1} parent=5 // pred_fallthru
        _
    $region6: #{tpu_custom_call.1} parent=1 // loop_footer
      %s22 = sadd.s32 1, %s18
    $region7: #{tpu_custom_call.1} parent=1 // loop_footer_branch
      %17 = sbr.rel target = $region3
    $region8: #{tpu_custom_call.1} parent=1 // loop_exit
      _
    %436 = vsyncpa [#allocation3], 1
    %s437 = scalar_lea.sflag [#allocation3], 1
    %438 = vsyncpa %s437, 1
    %439 = vsyncpa [#allocation6], 1
    %440 = vsyncpa [#allocation4], 1
    %s441 = scalar_lea.sflag [#allocation4], 1
    %442 = vsyncpa %s441, 1

</llo_original>
